<compile_context>
chip_gen: v7x
topology: tpu7x:2x2x1
jax: 0.10.0
libtpu: 0.0.40
codegen_flags: <defaults>
</compile_context>

<pallas_src>
import functools

import jax
import jax.numpy as jnp
from jax import lax
from jax.experimental import pallas as pl
from jax.experimental.pallas import tpu as pltpu


def _label_smoothing_kernel(x_ref, tgt_ref, out_ref, acc_ref, *,
                            confidence, smoothing, n_total, inner):
    # x_ref:   (tile_n, C)  input dtype (cast to f32 below)
    # tgt_ref: (tile_n, 1)  int32
    # out_ref: (1, 8, 128)  f32, one block per outer ("parallel") chunk
    # acc_ref: (tile_n, 1)  f32 VMEM scratch, per-row partial sums
    p = pl.program_id(0)
    i = pl.program_id(1)

    @pl.when(i == 0)
    def _init():
        acc_ref[...] = jnp.zeros_like(acc_ref)

    x = x_ref[...].astype(jnp.float32)                     # (tn, C)
    tn, c = x.shape

    # Numerically stable pieces of log_softmax (logprobs never materialized).
    x_max = jnp.max(x, axis=-1, keepdims=True)             # (tn, 1)
    shifted = x - x_max                                    # (tn, C)
    lse = jnp.log(jnp.sum(jnp.exp(shifted), axis=-1, keepdims=True))  # (tn, 1)

    # shifted[row, target[row]] via one-hot mask.
    tgt = tgt_ref[...]                                     # (tn, 1) int32
    col_ids = lax.broadcasted_iota(jnp.int32, (tn, c), 1)  # (tn, C)
    tgt_shift = jnp.sum(jnp.where(col_ids == tgt, shifted, 0.0),
                        axis=-1, keepdims=True)            # (tn, 1)
    sum_shift = jnp.sum(shifted, axis=-1, keepdims=True)   # (tn, 1)

    nll = lse - tgt_shift                                  # (tn, 1)
    smooth = c * lse - sum_shift                           # (tn, 1)
    loss_rows = confidence * nll + smoothing * smooth      # (tn, 1)

    # Mask rows past the end of the batch (tail tile / clamped overhang blocks).
    block_idx = p * inner + i
    row_ids = block_idx * tn + lax.broadcasted_iota(jnp.int32, (tn, 1), 0)
    loss_rows = jnp.where(row_ids < n_total, loss_rows, 0.0)

    acc_ref[...] += loss_rows

    @pl.when(i == pl.num_programs(1) - 1)
    def _finalize():
        partial = jnp.sum(acc_ref[...])                    # scalar
        out_ref[...] = jnp.full(out_ref.shape, partial, dtype=out_ref.dtype)


def _round_up(v, m):
    return ((v + m - 1) // m) * m


def _pick_tile_n(n, c, itemsize):
    # ~8 MiB per x buffer (pipeline double-buffers it -> ~16 MiB), generous
    # headroom under the 48 MiB scoped-VMEM limit on all generations.
    budget = 8 * 1024 * 1024
    rows = budget // max(c * itemsize, 1)
    rows = max(8, min(int(rows), 2048))
    rows = min(rows, _round_up(n, 8))
    rows = max(8, (rows // 8) * 8)
    return int(rows)


def label_smoothing_loss(x, target, smoothing=0.0, *, tile_n=None, num_chunks=2):
    """x: [N, C] float (any dtype), target: [N] int. Returns scalar f32 mean loss."""
    n, c = x.shape
    smoothing = float(smoothing)
    confidence = 1.0 - smoothing

    if tile_n is None:
        tile_n = _pick_tile_n(n, c, jnp.dtype(x.dtype).itemsize)

    nblocks = pl.cdiv(n, tile_n)
    p_axis = num_chunks if nblocks >= num_chunks else 1
    inner = int(pl.cdiv(nblocks, p_axis))

    tgt_2d = target.astype(jnp.int32).reshape(n, 1)

    # Clamp block indices so overhang grid steps (when P*inner > nblocks) stay
    # in-bounds; their rows are masked out inside the kernel.
    def row_block_map(p, i):
        return (jnp.minimum(p * inner + i, nblocks - 1), 0)

    kernel = functools.partial(
        _label_smoothing_kernel,
        confidence=confidence,
        smoothing=smoothing,
        n_total=int(n),
        inner=inner,
    )

    out = pl.pallas_call(
        kernel,
        out_shape=jax.ShapeDtypeStruct((p_axis, 8, 128), jnp.float32),
        grid_spec=pltpu.PrefetchScalarGridSpec(
            num_scalar_prefetch=0,
            grid=(p_axis, inner),
            in_specs=[
                pl.BlockSpec((tile_n, c), row_block_map),
                pl.BlockSpec((tile_n, 1), row_block_map),
            ],
            out_specs=pl.BlockSpec((1, 8, 128), lambda p, i: (p, 0, 0)),
            scratch_shapes=[pltpu.VMEM((tile_n, 1), jnp.float32)],
        ),
        compiler_params=pltpu.CompilerParams(
            dimension_semantics=("parallel", "arbitrary"),
            vmem_limit_bytes=48 * 1024 * 1024,
        ),
    )(x, tgt_2d)

    partials = out[:, 0, 0]                                # (p_axis,)
    return jnp.sum(partials) / jnp.float32(n)


def _reference(x, target, smoothing):
    confidence = 1.0 - smoothing
    logprobs = jax.nn.log_softmax(x.astype(jnp.float32), axis=-1)
    nll = -jnp.take_along_axis(logprobs, target[:, None], axis=-1)[:, 0]
    smooth = -jnp.sum(logprobs, axis=-1)
    return jnp.mean(confidence * nll + smoothing * smooth)


if __name__ == "__main__":
    key = jax.random.PRNGKey(0)
    k1, k2 = jax.random.split(key)

    N, C = 16, 32
    smoothing = 0.1

    x = jax.random.normal(k1, (N, C), dtype=jnp.float32)
    target = jax.random.randint(k2, (N,), 0, C, dtype=jnp.int32)

    loss = label_smoothing_loss(x, target, smoothing=smoothing)
    loss = jax.block_until_ready(loss)

    ref = _reference(x, target, smoothing)
    assert jnp.allclose(loss, ref, atol=1e-4, rtol=1e-4), (loss, ref)

    print("KERNEL_OK")
</pallas_src>

<mosaic_0001>
module attributes {stable_mosaic.version = 11 : i64} {
  func.func @_label_smoothing_kernel(%arg0: i32, %arg1: i32, %arg2: memref<16x32xf32, #tpu.memory_space<vmem>>, %arg3: memref<16x1xi32, #tpu.memory_space<vmem>>, %arg4: memref<1x8x128xf32, #tpu.memory_space<vmem>>, %arg5: memref<16x1xf32, #tpu.memory_space<vmem>>) attributes {dimension_semantics = [#tpu.dimension_semantics<parallel>, #tpu.dimension_semantics<arbitrary>], iteration_bounds = array<i64: 1, 1>, scalar_prefetch = 0 : i64, scratch_operands = 1 : i64, tpu.core_type = #tpu.core_type<tc>, window_params = [{transform_indices = @transform_0, window_bounds = array<i64: 16, 32>}, {transform_indices = @transform_1, window_bounds = array<i64: 16, 1>}, {transform_indices = @transform_2, window_bounds = array<i64: 1, 8, 128>}]} {
    %c0_i32 = arith.constant 0 : i32
    %0 = arith.cmpi eq, %arg1, %c0_i32 : i32
    %1 = arith.extui %0 : i1 to i32
    %c0_i32_0 = arith.constant 0 : i32
    %2 = arith.cmpi ne, %1, %c0_i32_0 : i32
    scf.if %2 {
      %cst_19 = arith.constant 0.000000e+00 : f32
      %47 = vector.broadcast %cst_19 : f32 to vector<16x1xf32>
      %c0_20 = arith.constant 0 : index
      %c0_21 = arith.constant 0 : index
      %48 = vector.load %arg5[%c0_20, %c0_21] : memref<16x1xf32, #tpu.memory_space<vmem>>, vector<16x1xf32>
      tpu.vector_store %arg5[%c0_20, %c0_21], %47 {strides = array<i32>} : memref<16x1xf32, #tpu.memory_space<vmem>>, vector<16x1xf32>,
    } else {
    }
    %c0 = arith.constant 0 : index
    %c0_1 = arith.constant 0 : index
    %3 = vector.load %arg2[%c0, %c0_1] : memref<16x32xf32, #tpu.memory_space<vmem>>, vector<16x32xf32>
    %cst = arith.constant dense<0xFF800000> : vector<16xf32>
    %4 = vector.multi_reduction <maximumf>, %3, %cst [1] : vector<16x32xf32> to vector<16xf32>
    %5 = vector.shape_cast %4 : vector<16xf32> to vector<16x1xf32>
    %6 = vector.broadcast %5 : vector<16x1xf32> to vector<16x32xf32>
    %7 = arith.subf %3, %6 : vector<16x32xf32>
    %8 = math.exp %7 : vector<16x32xf32>
    %cst_2 = arith.constant dense<0.000000e+00> : vector<16xf32>
    %9 = vector.multi_reduction <add>, %8, %cst_2 [1] : vector<16x32xf32> to vector<16xf32>
    %10 = vector.shape_cast %9 : vector<16xf32> to vector<16x1xf32>
    %11 = math.log %10 : vector<16x1xf32>
    %c0_3 = arith.constant 0 : index
    %c0_4 = arith.constant 0 : index
    %12 = vector.load %arg3[%c0_3, %c0_4] : memref<16x1xi32, #tpu.memory_space<vmem>>, vector<16x1xi32>
    %13 = tpu.iota {dimensions = array<i32: 1>} : vector<16x32xi32>
    %14 = vector.broadcast %12 : vector<16x1xi32> to vector<16x32xi32>
    %15 = arith.cmpi eq, %13, %14 : vector<16x32xi32>
    %cst_5 = arith.constant 0.000000e+00 : f32
    %16 = vector.broadcast %cst_5 : f32 to vector<16x32xf32>
    %17 = arith.select %15, %7, %16 : vector<16x32xi1>, vector<16x32xf32>
    %cst_6 = arith.constant dense<0.000000e+00> : vector<16xf32>
    %18 = vector.multi_reduction <add>, %17, %cst_6 [1] : vector<16x32xf32> to vector<16xf32>
    %19 = vector.shape_cast %18 : vector<16xf32> to vector<16x1xf32>
    %cst_7 = arith.constant dense<0.000000e+00> : vector<16xf32>
    %20 = vector.multi_reduction <add>, %7, %cst_7 [1] : vector<16x32xf32> to vector<16xf32>
    %21 = vector.shape_cast %20 : vector<16xf32> to vector<16x1xf32>
    %22 = arith.subf %11, %19 : vector<16x1xf32>
    %cst_8 = arith.constant 3.200000e+01 : f32
    %23 = vector.broadcast %cst_8 : f32 to vector<16x1xf32>
    %24 = arith.mulf %23, %11 : vector<16x1xf32>
    %25 = arith.subf %24, %21 : vector<16x1xf32>
    %cst_9 = arith.constant 0.899999976 : f32
    %26 = vector.broadcast %cst_9 : f32 to vector<16x1xf32>
    %27 = arith.mulf %26, %22 : vector<16x1xf32>
    %cst_10 = arith.constant 1.000000e-01 : f32
    %28 = vector.broadcast %cst_10 : f32 to vector<16x1xf32>
    %29 = arith.mulf %28, %25 : vector<16x1xf32>
    %30 = arith.addf %27, %29 : vector<16x1xf32>
    %c1_i32 = arith.constant 1 : i32
    %31 = arith.muli %arg0, %c1_i32 : i32
    %32 = arith.addi %31, %arg1 : i32
    %c16_i32 = arith.constant 16 : i32
    %33 = arith.muli %32, %c16_i32 : i32
    %34 = tpu.iota {dimensions = array<i32: 0>} : vector<16x1xi32>
    %35 = vector.broadcast %33 : i32 to vector<16x1xi32>
    %36 = arith.addi %35, %34 : vector<16x1xi32>
    %c16_i32_11 = arith.constant 16 : i32
    %37 = vector.broadcast %c16_i32_11 : i32 to vector<16x1xi32>
    %38 = arith.cmpi slt, %36, %37 : vector<16x1xi32>
    %cst_12 = arith.constant 0.000000e+00 : f32
    %39 = vector.broadcast %cst_12 : f32 to vector<16x1xf32>
    %40 = arith.select %38, %30, %39 : vector<16x1xi1>, vector<16x1xf32>
    %c0_13 = arith.constant 0 : index
    %c0_14 = arith.constant 0 : index
    %41 = vector.load %arg5[%c0_13, %c0_14] : memref<16x1xf32, #tpu.memory_space<vmem>>, vector<16x1xf32>
    %42 = arith.addf %41, %40 : vector<16x1xf32>
    %c0_15 = arith.constant 0 : index
    %c0_16 = arith.constant 0 : index
    %43 = vector.load %arg5[%c0_15, %c0_16] : memref<16x1xf32, #tpu.memory_space<vmem>>, vector<16x1xf32>
    tpu.vector_store %arg5[%c0_15, %c0_16], %42 {strides = array<i32>} : memref<16x1xf32, #tpu.memory_space<vmem>>, vector<16x1xf32>,
    %c0_i32_17 = arith.constant 0 : i32
    %44 = arith.cmpi eq, %arg1, %c0_i32_17 : i32
    %45 = arith.extui %44 : i1 to i32
    %c0_i32_18 = arith.constant 0 : i32
    %46 = arith.cmpi ne, %45, %c0_i32_18 : i32
    scf.if %46 {
      %c0_19 = arith.constant 0 : index
      %c0_20 = arith.constant 0 : index
      %47 = vector.load %arg5[%c0_19, %c0_20] : memref<16x1xf32, #tpu.memory_space<vmem>>, vector<16x1xf32>
      %48 = vector.shape_cast %47 : vector<16x1xf32> to vector<1x16x1xf32>
      %cst_21 = arith.constant dense<0.000000e+00> : vector<1xf32>
      %49 = vector.multi_reduction <add>, %48, %cst_21 [1, 2] : vector<1x16x1xf32> to vector<1xf32>
      %50 = vector.shape_cast %49 : vector<1xf32> to vector<1x1x1xf32>
      %51 = vector.extract %50[0, 0, 0] : f32 from vector<1x1x1xf32>
      %52 = vector.broadcast %51 : f32 to vector<1x8x128xf32>
      %c0_22 = arith.constant 0 : index
      %c0_23 = arith.constant 0 : index
      %c0_24 = arith.constant 0 : index
      %53 = vector.load %arg4[%c0_22, %c0_23, %c0_24] : memref<1x8x128xf32, #tpu.memory_space<vmem>>, vector<1x8x128xf32>
      tpu.vector_store %arg4[%c0_22, %c0_23, %c0_24], %52 {strides = array<i32>} : memref<1x8x128xf32, #tpu.memory_space<vmem>>, vector<1x8x128xf32>,
    } else {
    }
    return
  }
  func.func @transform_0(%arg0: i32, %arg1: i32) -> (i32, i32) {
    %c1_i32 = arith.constant 1 : i32
    %0 = arith.muli %arg0, %c1_i32 : i32
    %1 = arith.addi %0, %arg1 : i32
    %c0_i32 = arith.constant 0 : i32
    %2 = arith.minsi %1, %c0_i32 : i32
    %c0_i32_0 = arith.constant 0 : i32
    %c0_i32_1 = arith.constant 0 : i32
    return %2, %c0_i32_0 : i32, i32
  }
  func.func @transform_1(%arg0: i32, %arg1: i32) -> (i32, i32) {
    %c1_i32 = arith.constant 1 : i32
    %0 = arith.muli %arg0, %c1_i32 : i32
    %1 = arith.addi %0, %arg1 : i32
    %c0_i32 = arith.constant 0 : i32
    %2 = arith.minsi %1, %c0_i32 : i32
    %c0_i32_0 = arith.constant 0 : i32
    %c0_i32_1 = arith.constant 0 : i32
    return %2, %c0_i32_0 : i32, i32
  }
  func.func @transform_2(%arg0: i32, %arg1: i32) -> (i32, i32, i32) {
    %c0_i32 = arith.constant 0 : i32
    %c0_i32_0 = arith.constant 0 : i32
    %c0_i32_1 = arith.constant 0 : i32
    return %arg0, %c0_i32, %c0_i32_0 : i32, i32, i32
  }
}

</mosaic_0001>

<llo_original>
// kernel: tpu_custom_call.1
$region0: #{tpu_custom_call.1}
  #allocation0 [shape = 'u32[]', space=smem, size = 0x4, offset = 0x4, fixed_abs, tag = 'smem constant byte address 0x4 - core index']
  #allocation1 [shape = 'u32[144,128]{1,0:T(1,128)}', space=vmem, size = 0x12000, scoped, tag = 'internal scratch']
  #allocation2 [shape = 'f32[16,1]{1,0:T(8,128)}', space=vmem, size = 0x2000, scoped, tag = 'scratch operand']
  %s0 = inlined_call_operand.vmem [shape: f32[16,32], index: 0, kind: input, shape index: {}]
  %s1 = inlined_call_operand.vmem [shape: s32[16,1], index: 1, kind: input, shape index: {}]
  %s2 = inlined_call_operand.hbm [shape: f32[1,8,128], index: 2, kind: output, shape index: {}]
  %s3 = sld [smem:[#allocation0]]
  $region26: #{tpu_custom_call.1} parent=0
    _
  %s5 = ssub.s32 1, %s3
  %s6 = scalar_select 0, %s5, %s3
  $region1: #{tpu_custom_call.1} parent=0
    #allocation3 [shape = 'u8[4096]{0}', space=vmem, size = 0x1000, scoped, tag = 'output window, operand 0, single buffered']
    #allocation4 [shape = 's32[1]{0}', space=sflag, size = 0x4, scoped, tag = 'scoped memory for tpu_custom_call.1']
    %7 = vsyncpa [#allocation4], 0
    // Predicated region
    $region2: #{tpu_custom_call.1} parent=1 // pred_check
      _
    $region3: #{tpu_custom_call.1} parent=1 // pred_check_branch
      %9 = sbr.rel (0) target = $region5
    $region4: #{tpu_custom_call.1} parent=1 // pred_region
      %s10 = sadd.s32 0, 0
      %p11 = scmp.lt.s32.totalorder %s10, 0
      %s12 = scalar_select %p11, %s10, 0
      %s13 = smul.u32 2, %s12
      %p14 = scmp.lt.s32.totalorder %s13, 1
      %s15 = scalar_select %p14, %s13, 1
      %s16 = smul.addr %s15, 8
      %s17 = scalar_lea.vmem %s0, %s16
      %s18 = sadd.s32 0, 0
      %p19 = scmp.lt.s32.totalorder %s18, 0
      %s20 = scalar_select %p19, %s18, 0
      %s21 = smul.u32 2, %s20
    $region5: #{tpu_custom_call.1} parent=1 // pred_fallthru
      _
    // Predicated region
    $region6: #{tpu_custom_call.1} parent=1 // pred_check
      _
    $region7: #{tpu_custom_call.1} parent=1 // pred_check_branch
      %23 = sbr.rel (0) target = $region9
    $region8: #{tpu_custom_call.1} parent=1 // pred_region
      %s24 = sadd.s32 0, 0
      %p25 = scmp.lt.s32.totalorder %s24, 0
      %s26 = scalar_select %p25, %s24, 0
      %s27 = smul.u32 2, %s26
      %p28 = scmp.lt.s32.totalorder %s27, 1
      %s29 = scalar_select %p28, %s27, 1
      %s30 = smul.addr %s29, 8
      %s31 = scalar_lea.vmem %s1, %s30
      %s32 = sadd.s32 0, 0
      %p33 = scmp.lt.s32.totalorder %s32, 0
      %s34 = scalar_select %p33, %s32, 0
      %s35 = smul.u32 2, %s34
    $region9: #{tpu_custom_call.1} parent=1 // pred_fallthru
      _
    %s36 = sadd.s32 0, 0
    %p37 = scmp.lt.s32.totalorder %s36, 0
    %s38 = scalar_select %p37, %s36, 0
    %s39 = smul.u32 2, %s38
    %p40 = scmp.lt.s32.totalorder %s39, 1
    %s41 = scalar_select %p40, %s39, 1
    %s42 = smul.addr %s41, 8
    %s43 = scalar_lea.vmem %s0, %s42
    %s44 = sadd.s32 0, 0
    %p45 = scmp.lt.s32.totalorder %s44, 0
    %s46 = scalar_select %p45, %s44, 0
    %s47 = smul.u32 2, %s46
    %p48 = scmp.lt.s32.totalorder %s47, 1
    %s49 = scalar_select %p48, %s47, 1
    %s50 = smul.addr %s49, 8
    %s51 = scalar_lea.vmem %s1, %s50
    %s52 = sadd.s32 0, 0
    %p53 = scmp.lt.s32.totalorder %s52, 0
    %s54 = scalar_select %p53, %s52, 0
    %s55 = smul.u32 2, %s54
    %p56 = scmp.lt.s32.totalorder %s55, 1
    %s57 = scalar_select %p56, %s55, 1
    %s58 = smul.addr %s57, 8
    %s59 = scalar_lea.vmem %s0, %s58
    %s60 = sadd.s32 0, 0
    %p61 = scmp.lt.s32.totalorder %s60, 0
    %s62 = scalar_select %p61, %s60, 0
    %s63 = smul.u32 2, %s62
    %s64 = sadd.s32 0, 0
    %p65 = scmp.lt.s32.totalorder %s64, 0
    %s66 = scalar_select %p65, %s64, 0
    %s67 = smul.u32 2, %s66
    %p68 = scmp.lt.s32.totalorder %s67, 1
    %s69 = scalar_select %p68, %s67, 1
    %s70 = smul.addr %s69, 8
    %s71 = scalar_lea.vmem %s1, %s70
    %s72 = sadd.s32 0, 0
    %p73 = scmp.lt.s32.totalorder %s72, 0
    %s74 = scalar_select %p73, %s72, 0
    %s75 = smul.u32 2, %s74
    %p76 = scmp.eq.s32.totalorder 0, 0
    // Predicated region
    $region10: #{tpu_custom_call.1} parent=1 // pred_check
      %p77 = pneg %p76
    $region11: #{tpu_custom_call.1} parent=1 // pred_check_branch
      %79 = sbr.rel (%p77) target = $region13
    $region12: #{tpu_custom_call.1} parent=1 // pred_region
      %vm80 = vcmask 7168
      %81 = vst.msk [vmem:[#allocation2] sm:$0xff] %vm80, 0.0
      %82 = vst.msk [vmem:[#allocation2 + $0x8] sm:$0xff] %vm80, 0.0
    $region13: #{tpu_custom_call.1} parent=1 // pred_fallthru
      _
    %v83 = vld [vmem:[%s59] sm:$0xff]
    %v84 = vld [vmem:[%s59 + $0x8] sm:$0xff]
    %vm85 = vcmask 261120
    %v86 = vsel %vm85, %v83, -inf
    %87 = vmax.xlane.f32.xlu0 %v86
    %v88 = vpop.xlane.xlu0 %87
    %v89 = vsel %vm85, %v84, -inf
    %90 = vmax.xlane.f32.xlu0 %v89
    %v91 = vpop.xlane.xlu0 %90
    %v92 = vsub.f32 %v83, %v88
    %v93 = vsub.f32 %v84, %v91
    %v94 = vmul.f32 %v92, 1.442695
    %v95 = vpow.pop %v94
    %v96 = vmul.f32 %v93, 1.442695
    %v97 = vpow.pop %v96
    %v98 = vsel %vm85, %v95, 0.0
    %99 = vadd.xlane.f32.xlu0 %v98
    %v100 = vpop.xlane.xlu0 %99
    %v101 = vsel %vm85, %v97, 0.0
    %102 = vadd.xlane.f32.xlu0 %v101
    %v103 = vpop.xlane.xlu0 %102
    %v104 = vlog2.pop %v100
    %v105 = vmul.f32 %v104, 0.6931472
    %v106 = vlog2.pop %v103
    %v107 = vmul.f32 %v106, 0.6931472
    %v108 = vld [vmem:[%s71] sm:$0xff]
    %v109 = vld [vmem:[%s71 + $0x8] sm:$0xff]
    %v110 = vlaneseq
    %v111 = vand.u32 %v110, 127
    %112 = vset.pattern.permute.xlu0 0
    %113 = vperm.xlu0 %112, %v108
    %v114 = vpop.permute.xlu0 %113
    %115 = vset.pattern.permute.xlu0 0
    %116 = vperm.xlu0 %115, %v109
    %v117 = vpop.permute.xlu0 %116
    %vm118 = vcmp.eq.s32.totalorder %v111, %v114
    %vm119 = vcmp.eq.s32.totalorder %v111, %v117
    %v120 = vsel %vm118, %v92, 0.0
    %v121 = vsel %vm119, %v93, 0.0
    %v122 = vsel %vm85, %v120, 0.0
    %123 = vadd.xlane.f32.xlu0 %v122
    %v124 = vpop.xlane.xlu0 %123
    %v125 = vsel %vm85, %v121, 0.0
    %126 = vadd.xlane.f32.xlu0 %v125
    %v127 = vpop.xlane.xlu0 %126
    %v128 = vsel %vm85, %v92, 0.0
    %129 = vadd.xlane.f32.xlu0 %v128
    %v130 = vpop.xlane.xlu0 %129
    %v131 = vsel %vm85, %v93, 0.0
    %132 = vadd.xlane.f32.xlu0 %v131
    %v133 = vpop.xlane.xlu0 %132
    %v134 = vsub.f32 %v105, %v124
    %v135 = vsub.f32 %v107, %v127
    %v136 = vmul.f32 %v105, 32.0
    %v137 = vmul.f32 %v107, 32.0
    %v138 = vsub.f32 %v136, %v130
    %v139 = vsub.f32 %v137, %v133
    %v140 = vmul.f32 %v134, 0.9
    %v141 = vmul.f32 %v135, 0.9
    %v142 = vmul.f32 %v138, 0.1
    %v143 = vmul.f32 %v139, 0.1
    %v144 = vadd.f32 %v140, %v142
    %v145 = vadd.f32 %v141, %v143
    %s146 = sadd.s32 0, 0
    %s147 = smul.u32 %s146, 16
    %v148 = vlaneseq
    %v149 = vshrl.u32 %v148, 7
    %v150 = vadd.s32 %v149, 8
    %v151 = vstv %s147
    %v152 = vadd.s32 %v151, %v149
    %v153 = vadd.s32 %v151, %v150
    %vm154 = vcmp.lt.s32.totalorder %v152, 16
    %vm155 = vcmp.lt.s32.totalorder %v153, 16
    %v156 = vsel %vm154, %v144, 0.0
    %v157 = vsel %vm155, %v145, 0.0
    %v158 = vld [vmem:[#allocation2] sm:$0xff]
    %v159 = vld [vmem:[#allocation2 + $0x8] sm:$0xff]
    %v160 = vadd.f32 %v158, %v156
    %v161 = vadd.f32 %v159, %v157
    %vm162 = vcmask 7168
    %163 = vst.msk [vmem:[#allocation2] sm:$0xff] %vm162, %v160
    %164 = vst.msk [vmem:[#allocation2 + $0x8] sm:$0xff] %vm162, %v161
    // Predicated region
    $region14: #{tpu_custom_call.1} parent=1 // pred_check
      %p165 = pneg %p76
    $region15: #{tpu_custom_call.1} parent=1 // pred_check_branch
      %167 = sbr.rel (%p165) target = $region17
    $region16: #{tpu_custom_call.1} parent=1 // pred_region
      %v168 = vld [vmem:[#allocation2] sm:$0xff]
      %v169 = vld [vmem:[#allocation2 + $0x8] sm:$0xff]
      %v170 = vsel %vm162, %v168, 0.0
      %v171 = vsel %vm162, %v169, 0.0
      %v172 = vadd.f32 %v170, %v171
      %173 = vadd.xlane.f32.xlu0 %v172
      %v174 = vpop.xlane.xlu0 %173
      %v175 = vrot.slane %v174, 4
      %v176 = vadd.f32 %v174, %v175
      %v177 = vrot.slane %v176, 2
      %v178 = vadd.f32 %v176, %v177
      %v179 = vrot.slane %v178, 1
      %v180 = vadd.f32 %v178, %v179
      %s181 = vtos %v180
      %v182 = vstv %s181
      %183 = vst [vmem:[#allocation3] sm:$0xff] %v182
    $region17: #{tpu_custom_call.1} parent=1 // pred_fallthru
      _
    // Predicated region
    $region18: #{tpu_custom_call.1} parent=1 // pred_check
      _
    $region19: #{tpu_custom_call.1} parent=1 // pred_check_branch
      %185 = sbr.rel (0) target = $region21
    $region20: #{tpu_custom_call.1} parent=1 // pred_region
      %s187 = ssub.s32 128, 128
      %188 = vsyncadd [#allocation4], %s187
      %s190 = sshll.u32 [#allocation3], 4
      %s191 = int_to_ptr.vmem [resolvable:$true] %s190
      %193 = dma.vmem_to_hbm [thread:$0]  %s191, 128, %s2, [#allocation4]
    $region21: #{tpu_custom_call.1} parent=1 // pred_fallthru
      _
    // Predicated region
    $region22: #{tpu_custom_call.1} parent=1 // pred_check
      _
    $region23: #{tpu_custom_call.1} parent=1 // pred_check_branch
      %195 = sbr.rel (0) target = $region25
    $region24: #{tpu_custom_call.1} parent=1 // pred_region
      %196 = dma.done [#allocation4], 128
    $region25: #{tpu_custom_call.1} parent=1 // pred_fallthru
      _
    %197 = vsyncpa [#allocation4], 1

</llo_original>
